<compile_context>
chip_gen: v6e
topology: v6e:2x2x1
jax: 0.10.0
libtpu: 0.0.40
codegen_flags: <defaults>
</compile_context>

<pallas_src>
import functools

import jax
import jax.numpy as jnp
from jax.experimental import pallas as pl
from jax.experimental.pallas import tpu as pltpu


def _head_kernel(xT_ref, w1_ref, b1_ref, w2_ref, b2_ref, oT_ref):
    # hT = relu(W1 @ xT + b1), f32 accumulation on the MXU, elementwise in f32.
    h = jnp.dot(w1_ref[...], xT_ref[...], preferred_element_type=jnp.float32)
    h = jnp.maximum(h + b1_ref[...], 0.0)            # b1 is (n_hidden, 1)
    # oT = W2 @ hT + b2.  The cast of h back to bf16 is intentional: it keeps
    # the second matmul on the bf16 MXU path (reference uses the same math).
    o = jnp.dot(w2_ref[...], h.astype(w2_ref.dtype),
                preferred_element_type=jnp.float32)
    oT_ref[...] = (o + b2_ref[...]).astype(oT_ref.dtype)   # b2 is (n_classes, 1)


@functools.partial(jax.jit, static_argnames=("block_b",))
def classification_head(x, w1, b1, w2, b2, *, block_b=512):
    """ViT classification head: relu(x @ w1.T + b1) @ w2.T + b2.

    x : [B, d_model]
    w1: [n_hidden, d_model],  b1: [n_hidden]     (PyTorch nn.Linear layout)
    w2: [n_classes, n_hidden], b2: [n_classes]
    returns [B, n_classes] in x.dtype
    """
    B, d_model = x.shape
    n_hidden = w1.shape[0]
    n_classes = w2.shape[0]
    assert block_b % 128 == 0, "block_b must be a multiple of 128 (lane width)"

    # Wrapper-side layout plumbing: pad ragged batch, go feature-major so the
    # batch dimension is lane-dense inside the kernel, cast params to bf16.
    B_pad = block_b * pl.cdiv(B, block_b)
    xT = jnp.pad(x, ((0, B_pad - B), (0, 0))).T.astype(jnp.bfloat16)  # [d_model, B_pad]
    w1b = w1.astype(jnp.bfloat16)                                     # [n_hidden, d_model]
    w2b = w2.astype(jnp.bfloat16)                                     # [n_classes, n_hidden]
    b1c = b1.astype(jnp.float32).reshape(n_hidden, 1)
    b2c = b2.astype(jnp.float32).reshape(n_classes, 1)

    grid = (B_pad // block_b,)
    oT = pl.pallas_call(
        _head_kernel,
        out_shape=jax.ShapeDtypeStruct((n_classes, B_pad), jnp.float32),
        grid_spec=pltpu.PrefetchScalarGridSpec(
            num_scalar_prefetch=0,
            grid=grid,
            in_specs=[
                # xT tiled over batch (lane axis); weights/biases VMEM-resident
                # via constant block index maps.
                pl.BlockSpec((d_model, block_b), lambda i: (0, i)),
                pl.BlockSpec((n_hidden, d_model), lambda i: (0, 0)),
                pl.BlockSpec((n_hidden, 1), lambda i: (0, 0)),
                pl.BlockSpec((n_classes, n_hidden), lambda i: (0, 0)),
                pl.BlockSpec((n_classes, 1), lambda i: (0, 0)),
            ],
            out_specs=pl.BlockSpec((n_classes, block_b), lambda i: (0, i)),
        ),
        compiler_params=pltpu.CompilerParams(
            dimension_semantics=("parallel",),       # shards batch tiles across v7x TCs
            vmem_limit_bytes=32 * 1024 * 1024,       # safe on v5e/v6e/v7x; headroom at real ViT dims
        ),
    )(xT, w1b, b1c, w2b, b2c)

    return oT[:, :B].T.astype(x.dtype)               # back to [B, n_classes]


if __name__ == "__main__":
    # Small shapes consistent with the module: d_model=32, n_hidden=64,
    # n_classes=16.  B=200 is deliberately NOT a multiple of block_b to
    # exercise the ragged-batch padding path; block_b=128 gives a 2-step grid.
    B, d_model, n_hidden, n_classes = 200, 32, 64, 16

    key = jax.random.PRNGKey(0)
    kx, kw1, kb1, kw2, kb2 = jax.random.split(key, 5)

    x = jax.random.normal(kx, (B, d_model), dtype=jnp.float32)

    # PyTorch-Linear-style init, native nn.Linear layouts ([out, in]).
    lim1 = 1.0 / jnp.sqrt(d_model)
    w1 = jax.random.uniform(kw1, (n_hidden, d_model), jnp.float32, -lim1, lim1)
    b1 = jax.random.uniform(kb1, (n_hidden,), jnp.float32, -lim1, lim1)
    lim2 = 1.0 / jnp.sqrt(n_hidden)
    w2 = jax.random.uniform(kw2, (n_classes, n_hidden), jnp.float32, -lim2, lim2)
    b2 = jax.random.uniform(kb2, (n_classes,), jnp.float32, -lim2, lim2)

    out = classification_head(x, w1, b1, w2, b2, block_b=128)
    out = jax.block_until_ready(out)
    assert out.shape == (B, n_classes)

    # Reference with the same bf16-input / f32-accumulation math as the kernel.
    xb, w1b, w2b = (t.astype(jnp.bfloat16) for t in (x, w1, w2))
    h_ref = jnp.maximum(
        jnp.dot(xb, w1b.T, preferred_element_type=jnp.float32) + b1, 0.0)
    ref = jnp.dot(h_ref.astype(jnp.bfloat16), w2b.T,
                  preferred_element_type=jnp.float32) + b2
    assert jnp.allclose(out, ref, atol=5e-3, rtol=5e-3), \
        float(jnp.max(jnp.abs(out - ref)))

    # Coarse sanity check against pure-f32 math (bounds the bf16 quantization).
    ref_f32 = jnp.maximum(x @ w1.T + b1, 0.0) @ w2.T + b2
    assert jnp.allclose(out, ref_f32, atol=5e-2, rtol=5e-2)

    print("KERNEL_OK")
</pallas_src>

<mosaic_0001>
module attributes {stable_mosaic.version = 11 : i64} {
  func.func @_head_kernel(%arg0: i32, %arg1: memref<32x128xbf16, #tpu.memory_space<vmem>>, %arg2: memref<64x32xbf16, #tpu.memory_space<vmem>>, %arg3: memref<64x1xf32, #tpu.memory_space<vmem>>, %arg4: memref<16x64xbf16, #tpu.memory_space<vmem>>, %arg5: memref<16x1xf32, #tpu.memory_space<vmem>>, %arg6: memref<16x128xf32, #tpu.memory_space<vmem>>) attributes {dimension_semantics = [#tpu.dimension_semantics<parallel>], iteration_bounds = array<i64: 2>, scalar_prefetch = 0 : i64, scratch_operands = 0 : i64, tpu.core_type = #tpu.core_type<tc>, window_params = [{transform_indices = @transform_0, window_bounds = array<i64: 32, 128>}, {pipeline_mode = #tpu.pipeline_mode<synchronous>, transform_indices = @transform_1, window_bounds = array<i64: 64, 32>}, {pipeline_mode = #tpu.pipeline_mode<synchronous>, transform_indices = @transform_2, window_bounds = array<i64: 64, 1>}, {pipeline_mode = #tpu.pipeline_mode<synchronous>, transform_indices = @transform_3, window_bounds = array<i64: 16, 64>}, {pipeline_mode = #tpu.pipeline_mode<synchronous>, transform_indices = @transform_4, window_bounds = array<i64: 16, 1>}, {transform_indices = @transform_5, window_bounds = array<i64: 16, 128>}]} {
    %c0 = arith.constant 0 : index
    %c0_0 = arith.constant 0 : index
    %0 = vector.load %arg2[%c0, %c0_0] : memref<64x32xbf16, #tpu.memory_space<vmem>>, vector<64x32xbf16>
    %c0_1 = arith.constant 0 : index
    %c0_2 = arith.constant 0 : index
    %1 = vector.load %arg1[%c0_1, %c0_2] : memref<32x128xbf16, #tpu.memory_space<vmem>>, vector<32x128xbf16>
    %cst = arith.constant dense<0.000000e+00> : vector<64x128xf32>
    %2 = tpu.matmul %0, %1, %cst {dimension_numbers = #tpu.dot_dimension_numbers<[1], [0], [0], [1], [0, 0, 1, 1], [], []>} : vector<64x32xbf16>, vector<32x128xbf16>, vector<64x128xf32> -> vector<64x128xf32>
    %c0_3 = arith.constant 0 : index
    %c0_4 = arith.constant 0 : index
    %3 = vector.load %arg3[%c0_3, %c0_4] : memref<64x1xf32, #tpu.memory_space<vmem>>, vector<64x1xf32>
    %4 = vector.broadcast %3 : vector<64x1xf32> to vector<64x128xf32>
    %5 = arith.addf %2, %4 : vector<64x128xf32>
    %cst_5 = arith.constant 0.000000e+00 : f32
    %6 = vector.broadcast %cst_5 : f32 to vector<64x128xf32>
    %7 = arith.maximumf %5, %6 : vector<64x128xf32>
    %c0_6 = arith.constant 0 : index
    %c0_7 = arith.constant 0 : index
    %8 = vector.load %arg4[%c0_6, %c0_7] : memref<16x64xbf16, #tpu.memory_space<vmem>>, vector<16x64xbf16>
    %9 = arith.truncf %7 : vector<64x128xf32> to vector<64x128xbf16>
    %cst_8 = arith.constant dense<0.000000e+00> : vector<16x128xf32>
    %10 = tpu.matmul %8, %9, %cst_8 {dimension_numbers = #tpu.dot_dimension_numbers<[1], [0], [0], [1], [0, 0, 1, 1], [], []>} : vector<16x64xbf16>, vector<64x128xbf16>, vector<16x128xf32> -> vector<16x128xf32>
    %c0_9 = arith.constant 0 : index
    %c0_10 = arith.constant 0 : index
    %11 = vector.load %arg5[%c0_9, %c0_10] : memref<16x1xf32, #tpu.memory_space<vmem>>, vector<16x1xf32>
    %12 = vector.broadcast %11 : vector<16x1xf32> to vector<16x128xf32>
    %13 = arith.addf %10, %12 : vector<16x128xf32>
    %c0_11 = arith.constant 0 : index
    %c0_12 = arith.constant 0 : index
    %14 = vector.load %arg6[%c0_11, %c0_12] : memref<16x128xf32, #tpu.memory_space<vmem>>, vector<16x128xf32>
    tpu.vector_store %arg6[%c0_11, %c0_12], %13 {strides = array<i32>} : memref<16x128xf32, #tpu.memory_space<vmem>>, vector<16x128xf32>,
    return
  }
  func.func @transform_0(%arg0: i32) -> (i32, i32) {
    %c0_i32 = arith.constant 0 : i32
    %c0_i32_0 = arith.constant 0 : i32
    return %c0_i32, %arg0 : i32, i32
  }
  func.func @transform_1(%arg0: i32) -> (i32, i32) {
    %c0_i32 = arith.constant 0 : i32
    %c0_i32_0 = arith.constant 0 : i32
    %c0_i32_1 = arith.constant 0 : i32
    return %c0_i32, %c0_i32_0 : i32, i32
  }
  func.func @transform_2(%arg0: i32) -> (i32, i32) {
    %c0_i32 = arith.constant 0 : i32
    %c0_i32_0 = arith.constant 0 : i32
    %c0_i32_1 = arith.constant 0 : i32
    return %c0_i32, %c0_i32_0 : i32, i32
  }
  func.func @transform_3(%arg0: i32) -> (i32, i32) {
    %c0_i32 = arith.constant 0 : i32
    %c0_i32_0 = arith.constant 0 : i32
    %c0_i32_1 = arith.constant 0 : i32
    return %c0_i32, %c0_i32_0 : i32, i32
  }
  func.func @transform_4(%arg0: i32) -> (i32, i32) {
    %c0_i32 = arith.constant 0 : i32
    %c0_i32_0 = arith.constant 0 : i32
    %c0_i32_1 = arith.constant 0 : i32
    return %c0_i32, %c0_i32_0 : i32, i32
  }
  func.func @transform_5(%arg0: i32) -> (i32, i32) {
    %c0_i32 = arith.constant 0 : i32
    %c0_i32_0 = arith.constant 0 : i32
    return %c0_i32, %arg0 : i32, i32
  }
}

</mosaic_0001>

<llo_original>
// kernel: classification_head.1
$region0: #{classification_head.1}
  #allocation0 [shape = 'u32[]', space=smem, size = 0x4, offset = 0x4, fixed_abs, tag = 'smem constant byte address 0x4 - core index']
  #allocation1 [shape = 'u32[144,128]{1,0:T(1,128)}', space=vmem, size = 0x12000, scoped, tag = 'internal scratch']
  %s0 = inlined_call_operand.vmem [shape: bf16[32,256], index: 0, kind: input, shape index: {}]
  %s1 = inlined_call_operand.vmem [shape: bf16[64,32], index: 1, kind: input, shape index: {}]
  %s2 = inlined_call_operand.vmem [shape: f32[64,1], index: 2, kind: input, shape index: {}]
  %s3 = inlined_call_operand.vmem [shape: bf16[16,64], index: 3, kind: input, shape index: {}]
  %s4 = inlined_call_operand.vmem [shape: f32[16,1], index: 4, kind: input, shape index: {}]
  %s5 = inlined_call_operand.vmem [shape: f32[16,256], index: 5, kind: output, shape index: {}]
  %s6 = sld [smem:[#allocation0]]
  $region128: #{classification_head.1} parent=0
    _
  %s8 = ssub.s32 1, %s6
  %s9 = scalar_select 0, %s8, %s6
  $region1: #{classification_head.1} parent=0
    #allocation2 [shape = 'u8[16384]{0}', space=vmem, size = 0x4000, scoped, tag = 'input window, operand 0']
    #allocation3 [shape = 'u8[16384]{0}', space=vmem, size = 0x4000, scoped, tag = 'output window, operand 0']
    loop: start=0, step=1, limit=4
    $region2: #{classification_head.1} parent=1 // loop_pre_header
      _
    $region3: #{classification_head.1} parent=1 // loop_header
      %s11 = sphi 0, %s15
      %p12 = scmp.ge.s32.totalorder %s11, 4
      %s21 = sphi 0, %s23
      %s24 = sphi 0, %s21
      %s25 = sphi 0, %s24
      %s41 = sphi 0, %s25
      %s45 = sphi 0, %s45
      %s47 = sphi 0, %s45
      %s48 = sphi 0, %s47
      %s62 = sphi 0, %s48
      %s66 = sphi 0, %s66
      %s68 = sphi 0, %s66
      %s69 = sphi 0, %s68
      %s83 = sphi 0, %s69
      %s87 = sphi 0, %s87
      %s89 = sphi 0, %s87
      %s90 = sphi 0, %s89
      %s104 = sphi 0, %s90
      %s108 = sphi 0, %s108
      %s110 = sphi 0, %s108
      %s111 = sphi 0, %s110
      %s125 = sphi 0, %s111
      %s131 = sphi 0, %s133
      %s134 = sphi 0, %s131
      %s135 = sphi 0, %s134
      %s151 = sphi 0, %s135
    $region4: #{classification_head.1} parent=1 // loop_header_branch
      %14 = sbr.rel (%p12) target = $region8
    $region5: #{classification_head.1} parent=1 // loop_body
      %s16 = ssub.s32 %s11, 1
      %s17 = ssub.s32 %s11, 2
      %s18 = sadd.s32 %s11, 1
      %s19 = ssub.s32 %s11, %s18
      %p20 = scmp.eq.s32.totalorder %s19, 0
      %s22 = sadd.s32 %s21, 1
      %s23 = scalar_select %p20, %s21, %s22
      %p26 = pneg %p20
      %p27 = scmp.eq.s32.totalorder %s11, 1
      %p28 = por %p26, %p27
      %p29 = scmp.ne.s32.totalorder %s21, %s24
      %p30 = scmp.eq.s32.totalorder %s11, 0
      %p31 = por %p29, %p30
      %p32 = scmp.ne.s32.totalorder %s21, %s24
      %p33 = scmp.eq.s32.totalorder %s16, 1
      %p34 = por %p32, %p33
      %p35 = scmp.ne.s32.totalorder %s24, %s25
      %p36 = scmp.eq.s32.totalorder %s16, 0
      %p37 = por %p35, %p36
      %p38 = scmp.ne.s32.totalorder %s24, %s25
      %p39 = scmp.eq.s32.totalorder %s17, 1
      %p40 = por %p38, %p39
      %p42 = scmp.ne.s32.totalorder %s25, %s41
      %p43 = scmp.eq.s32.totalorder %s17, 0
      %p44 = por %p42, %p43
      %s46 = sadd.s32 %s45, 1
      %p49 = scmp.eq.s32.totalorder %s11, 1
      %p50 = scmp.ne.s32.totalorder %s45, %s47
      %p51 = scmp.eq.s32.totalorder %s11, 0
      %p52 = por %p50, %p51
      %p53 = scmp.ne.s32.totalorder %s45, %s47
      %p54 = scmp.eq.s32.totalorder %s16, 1
      %p55 = por %p53, %p54
      %p56 = scmp.ne.s32.totalorder %s47, %s48
      %p57 = scmp.eq.s32.totalorder %s16, 0
      %p58 = por %p56, %p57
      %p59 = scmp.ne.s32.totalorder %s47, %s48
      %p60 = scmp.eq.s32.totalorder %s17, 1
      %p61 = por %p59, %p60
      %p63 = scmp.ne.s32.totalorder %s48, %s62
      %p64 = scmp.eq.s32.totalorder %s17, 0
      %p65 = por %p63, %p64
      %s67 = sadd.s32 %s66, 1
      %p70 = scmp.eq.s32.totalorder %s11, 1
      %p71 = scmp.ne.s32.totalorder %s66, %s68
      %p72 = scmp.eq.s32.totalorder %s11, 0
      %p73 = por %p71, %p72
      %p74 = scmp.ne.s32.totalorder %s66, %s68
      %p75 = scmp.eq.s32.totalorder %s16, 1
      %p76 = por %p74, %p75
      %p77 = scmp.ne.s32.totalorder %s68, %s69
      %p78 = scmp.eq.s32.totalorder %s16, 0
      %p79 = por %p77, %p78
      %p80 = scmp.ne.s32.totalorder %s68, %s69
      %p81 = scmp.eq.s32.totalorder %s17, 1
      %p82 = por %p80, %p81
      %p84 = scmp.ne.s32.totalorder %s69, %s83
      %p85 = scmp.eq.s32.totalorder %s17, 0
      %p86 = por %p84, %p85
      %s88 = sadd.s32 %s87, 1
      %p91 = scmp.eq.s32.totalorder %s11, 1
      %p92 = scmp.ne.s32.totalorder %s87, %s89
      %p93 = scmp.eq.s32.totalorder %s11, 0
      %p94 = por %p92, %p93
      %p95 = scmp.ne.s32.totalorder %s87, %s89
      %p96 = scmp.eq.s32.totalorder %s16, 1
      %p97 = por %p95, %p96
      %p98 = scmp.ne.s32.totalorder %s89, %s90
      %p99 = scmp.eq.s32.totalorder %s16, 0
      %p100 = por %p98, %p99
      %p101 = scmp.ne.s32.totalorder %s89, %s90
      %p102 = scmp.eq.s32.totalorder %s17, 1
      %p103 = por %p101, %p102
      %p105 = scmp.ne.s32.totalorder %s90, %s104
      %p106 = scmp.eq.s32.totalorder %s17, 0
      %p107 = por %p105, %p106
      %s109 = sadd.s32 %s108, 1
      %p112 = scmp.eq.s32.totalorder %s11, 1
      %p113 = scmp.ne.s32.totalorder %s108, %s110
      %p114 = scmp.eq.s32.totalorder %s11, 0
      %p115 = por %p113, %p114
      %p116 = scmp.ne.s32.totalorder %s108, %s110
      %p117 = scmp.eq.s32.totalorder %s16, 1
      %p118 = por %p116, %p117
      %p119 = scmp.ne.s32.totalorder %s110, %s111
      %p120 = scmp.eq.s32.totalorder %s16, 0
      %p121 = por %p119, %p120
      %p122 = scmp.ne.s32.totalorder %s110, %s111
      %p123 = scmp.eq.s32.totalorder %s17, 1
      %p124 = por %p122, %p123
      %p126 = scmp.ne.s32.totalorder %s111, %s125
      %p127 = scmp.eq.s32.totalorder %s17, 0
      %p128 = por %p126, %p127
      %s129 = ssub.s32 %s11, %s18
      %p130 = scmp.eq.s32.totalorder %s129, 0
      %s132 = sadd.s32 %s131, 1
      %s133 = scalar_select %p130, %s131, %s132
      %p136 = pneg %p130
      %p137 = scmp.eq.s32.totalorder %s11, 1
      %p138 = por %p136, %p137
      %p139 = scmp.ne.s32.totalorder %s131, %s134
      %p140 = scmp.eq.s32.totalorder %s11, 0
      %p141 = por %p139, %p140
      %p142 = scmp.ne.s32.totalorder %s131, %s134
      %p143 = scmp.eq.s32.totalorder %s16, 1
      %p144 = por %p142, %p143
      %p145 = scmp.ne.s32.totalorder %s134, %s135
      %p146 = scmp.eq.s32.totalorder %s16, 0
      %p147 = por %p145, %p146
      %p148 = scmp.ne.s32.totalorder %s134, %s135
      %p149 = scmp.eq.s32.totalorder %s17, 1
      %p150 = por %p148, %p149
      %p152 = scmp.ne.s32.totalorder %s135, %s151
      %p153 = scmp.eq.s32.totalorder %s17, 0
      %p154 = por %p152, %p153
      %p155 = scmp.le.s32.totalorder 1, %s11
      %p156 = scmp.lt.s32.totalorder %s11, 3
      %p157 = pnand %p155, %p156
      %p158 = pneg %p157
      // Predicated region
      $region9: #{classification_head.1} parent=5 // pred_check
        _
      $region10: #{classification_head.1} parent=5 // pred_check_branch
        %160 = sbr.rel (%p157) target = $region12
      $region11: #{classification_head.1} parent=5 // pred_region
        %s161 = ssub.s32 %s11, 1
        // Predicated region
        $region13: #{classification_head.1} parent=11 // pred_check
          %p162 = pneg %p58
        $region14: #{classification_head.1} parent=11 // pred_check_branch
          %164 = sbr.rel (%p162) target = $region16
        $region15: #{classification_head.1} parent=11 // pred_region
          _
        $region16: #{classification_head.1} parent=11 // pred_fallthru
          _
        // Predicated region
        $region17: #{classification_head.1} parent=11 // pred_check
          %p165 = pneg %p79
        $region18: #{classification_head.1} parent=11 // pred_check_branch
          %167 = sbr.rel (%p165) target = $region20
        $region19: #{classification_head.1} parent=11 // pred_region
          _
        $region20: #{classification_head.1} parent=11 // pred_fallthru
          _
        // Predicated region
        $region21: #{classification_head.1} parent=11 // pred_check
          %p168 = pneg %p100
        $region22: #{classification_head.1} parent=11 // pred_check_branch
          %170 = sbr.rel (%p168) target = $region24
        $region23: #{classification_head.1} parent=11 // pred_region
          _
        $region24: #{classification_head.1} parent=11 // pred_fallthru
          _
        // Predicated region
        $region25: #{classification_head.1} parent=11 // pred_check
          %p171 = pneg %p121
        $region26: #{classification_head.1} parent=11 // pred_check_branch
          %173 = sbr.rel (%p171) target = $region28
        $region27: #{classification_head.1} parent=11 // pred_region
          _
        $region28: #{classification_head.1} parent=11 // pred_fallthru
          _
      $region12: #{classification_head.1} parent=5 // pred_fallthru
        _
      %p174 = scmp.lt.s32.totalorder %s11, 2
      // Predicated region
      $region29: #{classification_head.1} parent=5 // pred_check
        %p175 = pneg %p174
      $region30: #{classification_head.1} parent=5 // pred_check_branch
        %177 = sbr.rel (%p175) target = $region32
      $region31: #{classification_head.1} parent=5 // pred_region
        // Predicated region
        $region33: #{classification_head.1} parent=31 // pred_check
          %p178 = pneg %p31
        $region34: #{classification_head.1} parent=31 // pred_check_branch
          %180 = sbr.rel (%p178) target = $region36
        $region35: #{classification_head.1} parent=31 // pred_region
          %s181 = sand.u32 %s21, 1
          %s182 = sand.u32 %s21, 1
          %s183 = smul.addr %s182, 16
          %s184 = scalar_lea.vmem [#allocation2], %s183
          %s185 = smul.addr %s11, 4
          %s186 = scalar_lea.vmem %s0, %s185
          // Predicated region
          $region37: #{classification_head.1} parent=35 // pred_check
            _
          $region38: #{classification_head.1} parent=35 // pred_check_branch
            %188 = sbr.rel (0) target = $region40
          $region39: #{classification_head.1} parent=35 // pred_region
            // Predicated region
            $region41: #{classification_head.1} parent=39 // pred_check
              _
            $region42: #{classification_head.1} parent=39 // pred_check_branch
              %190 = sbr.rel target = $region44
            $region43: #{classification_head.1} parent=39 // pred_region
              // Predicated region
              $region56: #{classification_head.1} parent=43 // pred_check
                _
              $region57: #{classification_head.1} parent=43 // pred_check_branch
                %212 = sbr.rel (0) target = $region59
              $region58: #{classification_head.1} parent=43 // pred_region
                loop: start=0, step=1, limit=1
                $region60: #{classification_head.1} parent=58 // loop_pre_header
                  _
                $region61: #{classification_head.1} parent=58 // loop_header
                  %s214 = sphi 0, %s218
                  %p215 = scmp.ge.s32.totalorder %s214, 1
                  %s219 = sphi %s186, %s186
                  %s220 = sphi %s184, %s184
                $region62: #{classification_head.1} parent=58 // loop_header_branch
                  %217 = sbr.rel (%p215) target = $region66
                $region63: #{classification_head.1} parent=58 // loop_body
                  _
                $region64: #{classification_head.1} parent=58 // loop_footer
                  %s218 = sadd.s32 1, %s214
                $region65: #{classification_head.1} parent=58 // loop_footer_branch
                  %213 = sbr.rel target = $region61
                $region66: #{classification_head.1} parent=58 // loop_exit
                  _
                %s222 = ssub.s32 16, 1
                loop: start=0, step=1, limit=1
                $region67: #{classification_head.1} parent=58 // loop_pre_header
                  _
                $region68: #{classification_head.1} parent=58 // loop_header
                  %s224 = sphi 0, %s228
                  %p225 = scmp.ge.s32.totalorder %s224, 1
                  %s229 = sphi %s186, %s186
                  %s230 = sphi %s184, %s184
                $region69: #{classification_head.1} parent=58 // loop_header_branch
                  %227 = sbr.rel (%p225) target = $region73
                $region70: #{classification_head.1} parent=58 // loop_body
                  %v231 = vld [vmem:[%s229] sm:%s222]
                  %232 = vst [vmem:[%s230] sm:%s222] %v231
                  %v233 = vld [vmem:[%s229 + $0x8] sm:%s222]
                  %234 = vst [vmem:[%s230 + $0x4] sm:%s222] %v233
                  %v235 = vld [vmem:[%s229 + $0x10] sm:%s222]
                  %236 = vst [vmem:[%s230 + $0x8] sm:%s222] %v235
                  %v237 = vld [vmem:[%s229 + $0x18] sm:%s222]
                  %238 = vst [vmem:[%s230 + $0xc] sm:%s222] %v237
                $region71: #{classification_head.1} parent=58 // loop_footer
                  %s228 = sadd.s32 1, %s224
                $region72: #{classification_head.1} parent=58 // loop_footer_branch
                  %223 = sbr.rel target = $region68
                $region73: #{classification_head.1} parent=58 // loop_exit
                  _
              $region59: #{classification_head.1} parent=43 // pred_fallthru
                _
            $region44: #{classification_head.1} parent=39 // pred_fallthru
              _
            // Predicated region
            $region45: #{classification_head.1} parent=39 // pred_check
              _
            $region46: #{classification_head.1} parent=39 // pred_check_branch
              %192 = sbr.rel (0) target = $region48
            $region47: #{classification_head.1} parent=39 // pred_region
              %s194 = ssub.s32 16, 1
              loop: start=0, step=1, limit=1
              $region49: #{classification_head.1} parent=47 // loop_pre_header
                _
              $region50: #{classification_head.1} parent=47 // loop_header
                %s196 = sphi 0, %s200
                %p197 = scmp.ge.s32.totalorder %s196, 1
                %s201 = sphi %s186, %s186
                %s202 = sphi %s184, %s184
              $region51: #{classification_head.1} parent=47 // loop_header_branch
                %199 = sbr.rel (%p197) target = $region55
              $region52: #{classification_head.1} parent=47 // loop_body
                %v203 = vld [vmem:[%s201] sm:%s194]
                %204 = vst [vmem:[%s202] sm:%s194] %v203
                %v205 = vld [vmem:[%s201 + $0x8] sm:%s194]
                %206 = vst [vmem:[%s202 + $0x4] sm:%s194] %v205
                %v207 = vld [vmem:[%s201 + $0x10] sm:%s194]
                %208 = vst [vmem:[%s202 + $0x8] sm:%s194] %v207
                %v209 = vld [vmem:[%s201 + $0x18] sm:%s194]
                %210 = vst [vmem:[%s202 + $0xc] sm:%s194] %v209
              $region53: #{classification_head.1} parent=47 // loop_footer
                %s200 = sadd.s32 1, %s196
              $region54: #{classification_head.1} parent=47 // loop_footer_branch
                %195 = sbr.rel target = $region50
              $region55: #{classification_head.1} parent=47 // loop_exit
                _
            $region48: #{classification_head.1} parent=39 // pred_fallthru
              _
          $region40: #{classification_head.1} parent=35 // pred_fallthru
            _
          %239 = vnop
        $region36: #{classification_head.1} parent=31 // pred_fallthru
          _
      $region32: #{classification_head.1} parent=5 // pred_fallthru
        _
      %p240 = scmp.le.s32.totalorder 1, %s11
      %p241 = scmp.lt.s32.totalorder %s11, 3
      %p242 = pnand %p240, %p241
      %p243 = pneg %p242
      // Predicated region
      $region74: #{classification_head.1} parent=5 // pred_check
        _
      $region75: #{classification_head.1} parent=5 // pred_check_branch
        %245 = sbr.rel (%p242) target = $region77
      $region76: #{classification_head.1} parent=5 // pred_region
        %s246 = ssub.s32 %s11, 1
        %s247 = sand.u32 %s24, 1
        %s248 = sand.u32 %s24, 1
        %s249 = smul.addr %s248, 16
        %s250 = scalar_lea.vmem [#allocation2], %s249
        // Predicated region
        $region78: #{classification_head.1} parent=76 // pred_check
          %p251 = pneg %p37
        $region79: #{classification_head.1} parent=76 // pred_check_branch
          %253 = sbr.rel (%p251) target = $region81
        $region80: #{classification_head.1} parent=76 // pred_region
          _
        $region81: #{classification_head.1} parent=76 // pred_fallthru
          _
        %s254 = sand.u32 %s24, 1
        %s255 = sand.u32 %s24, 1
        %s256 = smul.addr %s255, 16
        %s257 = scalar_lea.vmem [#allocation2], %s256
        %p258 = pneg %p37
        %p259 = pneg %p34
        %p260 = pneg %p58
        %p261 = pneg %p55
        %p262 = pneg %p79
        %p263 = pneg %p76
        %p264 = pneg %p100
        %p265 = pneg %p97
        %p266 = pneg %p121
        %p267 = pneg %p118
        %p268 = pneg %p147
        %p269 = pneg %p144
        %s270 = sand.u32 %s134, 1
        %s271 = sand.u32 %s134, 1
        %s272 = smul.addr %s271, 16
        %s273 = scalar_lea.vmem [#allocation3], %s272
        %v275 = vld [vmem:[%s1] sm:$0xf]
        %v276 = vld [vmem:[%s1 + $0x4] sm:$0xf]
        %v277 = vld [vmem:[%s1 + $0x8] sm:$0xf]
        %v278 = vld [vmem:[%s1 + $0xc] sm:$0xf]
        %v279 = vld [vmem:[%s1 + $0x10] sm:$0xf]
        %v280 = vld [vmem:[%s1 + $0x14] sm:$0xf]
        %v281 = vld [vmem:[%s1 + $0x18] sm:$0xf]
        %v282 = vld [vmem:[%s1 + $0x1c] sm:$0xf]
        %v283 = vld [vmem:[%s250] sm:$0xf]
        %v284 = vld [vmem:[%s250 + $0x4] sm:$0xf]
        %v285 = vld [vmem:[%s250 + $0x8] sm:$0xf]
        %v286 = vld [vmem:[%s250 + $0xc] sm:$0xf]
        %v287 = vld [vmem:[%s2] sm:$0xff]
        %v288 = vld [vmem:[%s2 + $0x8] sm:$0xff]
        %v289 = vld [vmem:[%s2 + $0x10] sm:$0xff]
        %v290 = vld [vmem:[%s2 + $0x18] sm:$0xff]
        %v291 = vld [vmem:[%s2 + $0x20] sm:$0xff]
        %v292 = vld [vmem:[%s2 + $0x28] sm:$0xff]
        %v293 = vld [vmem:[%s2 + $0x30] sm:$0xff]
        %v294 = vld [vmem:[%s2 + $0x38] sm:$0xff]
        %296 = vset.pattern.permute.xlu0 0
        %297 = vperm.xlu0 %296, %v287
        %v298 = vpop.permute.xlu0 %297
        %301 = vset.pattern.permute.xlu0 0
        %302 = vperm.xlu0 %301, %v288
        %v303 = vpop.permute.xlu0 %302
        %306 = vset.pattern.permute.xlu0 0
        %307 = vperm.xlu0 %306, %v289
        %v308 = vpop.permute.xlu0 %307
        %311 = vset.pattern.permute.xlu0 0
        %312 = vperm.xlu0 %311, %v290
        %v313 = vpop.permute.xlu0 %312
        %316 = vset.pattern.permute.xlu0 0
        %317 = vperm.xlu0 %316, %v291
        %v318 = vpop.permute.xlu0 %317
        %321 = vset.pattern.permute.xlu0 0
        %322 = vperm.xlu0 %321, %v292
        %v323 = vpop.permute.xlu0 %322
        %326 = vset.pattern.permute.xlu0 0
        %327 = vperm.xlu0 %326, %v293
        %v328 = vpop.permute.xlu0 %327
        %331 = vset.pattern.permute.xlu0 0
        %332 = vperm.xlu0 %331, %v294
        %v333 = vpop.permute.xlu0 %332
        %v343 = vunpack.c.l.b16 %v275
        %v344 = vunpack.c.l.b16 %v276
        %v345 = vunpack.c.l.b16 %v277
        %v346 = vunpack.c.l.b16 %v278
        %v347 = vunpack.c.l.b16 %v279
        %v348 = vunpack.c.l.b16 %v280
        %v349 = vunpack.c.l.b16 %v281
        %v350 = vunpack.c.l.b16 %v282
        %v351 = vpack.c.b16 %v344, %v343
        %v352 = vpack.c.b16 %v346, %v345
        %v353 = vpack.c.b16 %v348, %v347
        %v354 = vpack.c.b16 %v350, %v349
        %v359 = vunpack.c.l.b16 %v283
        %v360 = vunpack.c.l.b16 %v284
        %v361 = vunpack.c.l.b16 %v285
        %v362 = vunpack.c.l.b16 %v286
        %v363 = vpack.c.b16 %v360, %v359
        %v364 = vpack.c.b16 %v362, %v361
        %vm367 = vcmask 261120
        %v369 = vsel %vm367, %v351, 0
        %v372 = vsel %vm367, %v352, 0
        %v375 = vsel %vm367, %v353, 0
        %v378 = vsel %vm367, %v354, 0
        %380 = vmatprep.subr.bf16.mxu0 0
        %381 = vmatpush1.bf16.msra.mxu0 0
        %382 = vmatprep.subr.bf16.mxu0 0
        %383 = vmatpush1.bf16.msra.mxu0 0
        %384 = vmatprep.subr.bf16.mxu0 0
        %385 = vmatpush1.bf16.msra.mxu0 0
        %386 = vmatprep.subr.bf16.mxu0 0
        %387 = vmatpush1.bf16.msra.mxu0 0
        %388 = vmatprep.subr.bf16.mxu0 0
        %389 = vmatpush1.bf16.msra.mxu0 0
        %390 = vmatprep.subr.bf16.mxu0 0
        %391 = vmatpush1.bf16.msra.mxu0 0
        %392 = vmatprep.subr.bf16.mxu0 0
        %393 = vmatpush1.bf16.msra.mxu0 %v364
        %394 = vmatprep.subr.bf16.mxu0 0
        %395 = vmatpush1.bf16.msra.mxu0 %v363
        %396 = vmatprep.subr.bf16.mxu0 0
        %397 = vmatpush2.bf16.msra.mxu0 0
        %398 = vmatprep.subr.bf16.mxu0 0
        %399 = vmatpush2.bf16.msra.mxu0 0
        %400 = vmatprep.subr.bf16.mxu0 0
        %401 = vmatpush2.bf16.msra.mxu0 0
        %402 = vmatprep.subr.bf16.mxu0 0
        %403 = vmatpush2.bf16.msra.mxu0 0
        %404 = vmatprep.subr.bf16.mxu0 0
        %405 = vmatpush2.bf16.msra.mxu0 0
        %406 = vmatprep.subr.bf16.mxu0 0
        %407 = vmatpush2.bf16.msra.mxu0 0
        %408 = vmatprep.subr.bf16.mxu0 0
        %409 = vmatpush2.bf16.msra.mxu0 0
        %410 = vmatprep.subr.bf16.mxu0 0
        %411 = vmatpush2.bf16.msra.mxu0 0
        %412 = vmatprep.mubr.bf16.mxu0 0
        %413 = vmatmul.mubr.bf16.gmra.mxu0 %v369
        %v414 = vpop.f32.mrf.mxu0
        %v415 = vadd.f32 %v298, %v414
        %v416 = vpop.f32.mrf.mxu0
        %v417 = vpop.f32.mrf.mxu0
        %v418 = vadd.f32 %v303, %v417
        %v419 = vpop.f32.mrf.mxu0
        %420 = vmatprep.mubr.bf16.mxu0 0
        %421 = vmatmul.mubr.bf16.gmra.mxu0 %v372
        %v422 = vpop.f32.mrf.mxu0
        %v423 = vadd.f32 %v308, %v422
        %v424 = vpop.f32.mrf.mxu0
        %v425 = vpop.f32.mrf.mxu0
        %v426 = vadd.f32 %v313, %v425
        %v427 = vpop.f32.mrf.mxu0
        %428 = vmatprep.mubr.bf16.mxu0 0
        %429 = vmatmul.mubr.bf16.gmra.mxu0 %v375
        %v430 = vpop.f32.mrf.mxu0
        %v431 = vadd.f32 %v318, %v430
        %v432 = vpop.f32.mrf.mxu0
        %v433 = vpop.f32.mrf.mxu0
        %v434 = vadd.f32 %v323, %v433
        %v435 = vpop.f32.mrf.mxu0
        %436 = vmatprep.mubr.bf16.mxu0 0
        %437 = vmatmul.mubr.bf16.gmra.mxu0 %v378
        %v438 = vpop.f32.mrf.mxu0
        %v439 = vadd.f32 %v328, %v438
        %v440 = vpop.f32.mrf.mxu0
        %v441 = vpop.f32.mrf.mxu0
        %v442 = vadd.f32 %v333, %v441
        %v443 = vpop.f32.mrf.mxu0
        %444 = vdwg.mxu0
        %v445 = vmax.f32 %v415, 0.0
        %v446 = vmax.f32 %v418, 0.0
        %v447 = vmax.f32 %v423, 0.0
        %v448 = vmax.f32 %v426, 0.0
        %v449 = vmax.f32 %v431, 0.0
        %v450 = vmax.f32 %v434, 0.0
        %v451 = vmax.f32 %v439, 0.0
        %v452 = vmax.f32 %v442, 0.0
        %v453 = vld [vmem:[%s3] sm:$0xf]
        %v454 = vld [vmem:[%s3 + $0x4] sm:$0xf]
        %v455 = vpack.c.bf16 %v446, %v445
        %v456 = vpack.c.bf16 %v448, %v447
        %v457 = vpack.c.bf16 %v450, %v449
        %v458 = vpack.c.bf16 %v452, %v451
        %v459 = vld [vmem:[%s4] sm:$0xff]
        %v460 = vld [vmem:[%s4 + $0x8] sm:$0xff]
        %462 = vset.pattern.permute.xlu0 0
        %463 = vperm.xlu0 %462, %v459
        %v464 = vpop.permute.xlu0 %463
        %467 = vset.pattern.permute.xlu0 0
        %468 = vperm.xlu0 %467, %v460
        %v469 = vpop.permute.xlu0 %468
        %v473 = vunpack.c.l.b16 %v453
        %v474 = vunpack.c.l.b16 %v454
        %v475 = vpack.c.b16 %v474, %v473
        %vm476 = vcmask 523264
        %v478 = vsel %vm476, %v475, 0
        %480 = vmatprep.subr.bf16.mxu0 0
        %481 = vmatpush1.bf16.msra.mxu0 0
        %482 = vmatprep.subr.bf16.mxu0 0
        %483 = vmatpush1.bf16.msra.mxu0 0
        %484 = vmatprep.subr.bf16.mxu0 0
        %485 = vmatpush1.bf16.msra.mxu0 0
        %486 = vmatprep.subr.bf16.mxu0 0
        %487 = vmatpush1.bf16.msra.mxu0 0
        %488 = vmatprep.subr.bf16.mxu0 0
        %489 = vmatpush1.bf16.msra.mxu0 %v458
        %490 = vmatprep.subr.bf16.mxu0 0
        %491 = vmatpush1.bf16.msra.mxu0 %v457
        %492 = vmatprep.subr.bf16.mxu0 0
        %493 = vmatpush1.bf16.msra.mxu0 %v456
        %494 = vmatprep.subr.bf16.mxu0 0
        %495 = vmatpush1.bf16.msra.mxu0 %v455
        %496 = vmatprep.subr.bf16.mxu0 0
        %497 = vmatpush2.bf16.msra.mxu0 0
        %498 = vmatprep.subr.bf16.mxu0 0
        %499 = vmatpush2.bf16.msra.mxu0 0
        %500 = vmatprep.subr.bf16.mxu0 0
        %501 = vmatpush2.bf16.msra.mxu0 0
        %502 = vmatprep.subr.bf16.mxu0 0
        %503 = vmatpush2.bf16.msra.mxu0 0
        %504 = vmatprep.subr.bf16.mxu0 0
        %505 = vmatpush2.bf16.msra.mxu0 0
        %506 = vmatprep.subr.bf16.mxu0 0
        %507 = vmatpush2.bf16.msra.mxu0 0
        %508 = vmatprep.subr.bf16.mxu0 0
        %509 = vmatpush2.bf16.msra.mxu0 0
        %510 = vmatprep.subr.bf16.mxu0 0
        %511 = vmatpush2.bf16.msra.mxu0 0
        %512 = vmatprep.mubr.bf16.mxu0 0
        %513 = vmatmul.mubr.bf16.gmra.mxu0 %v478
        %v514 = vpop.f32.mrf.mxu0
        %v515 = vadd.f32 %v464, %v514
        %v516 = vpop.f32.mrf.mxu0
        %v517 = vpop.f32.mrf.mxu0
        %v518 = vadd.f32 %v469, %v517
        %v519 = vpop.f32.mrf.mxu0
        %520 = vdwg.mxu0
        %521 = vst [vmem:[%s273] sm:$0xff] %v515
        %522 = vst [vmem:[%s273 + $0x8] sm:$0xff] %v518
        %s523 = sand.u32 %s134, 1
        %s524 = sand.u32 %s134, 1
        %s525 = smul.addr %s524, 16
        %s526 = scalar_lea.vmem [#allocation3], %s525
        // Predicated region
        $region82: #{classification_head.1} parent=76 // pred_check
          %p527 = pneg %p144
        $region83: #{classification_head.1} parent=76 // pred_check_branch
          %529 = sbr.rel (%p527) target = $region85
        $region84: #{classification_head.1} parent=76 // pred_region
          %s530 = smul.addr %s16, 8
          %s531 = scalar_lea.vmem %s5, %s530
          // Predicated region
          $region86: #{classification_head.1} parent=84 // pred_check
            _
          $region87: #{classification_head.1} parent=84 // pred_check_branch
            %533 = sbr.rel (0) target = $region89
          $region88: #{classification_head.1} parent=84 // pred_region
            // Predicated region
            $region90: #{classification_head.1} parent=88 // pred_check
              _
            $region91: #{classification_head.1} parent=88 // pred_check_branch
              %535 = sbr.rel (0) target = $region93
            $region92: #{classification_head.1} parent=88 // pred_region
              // Predicated region
              $region105: #{classification_head.1} parent=92 // pred_check
                _
              $region106: #{classification_head.1} parent=92 // pred_check_branch
                %553 = sbr.rel (0) target = $region108
              $region107: #{classification_head.1} parent=92 // pred_region
                loop: start=0, step=1, limit=1
                $region109: #{classification_head.1} parent=107 // loop_pre_header
                  _
                $region110: #{classification_head.1} parent=107 // loop_header
                  %s555 = sphi 0, %s559
                  %p556 = scmp.ge.s32.totalorder %s555, 1
                  %s560 = sphi %s526, %s526
                  %s561 = sphi %s531, %s531
                $region111: #{classification_head.1} parent=107 // loop_header_branch
                  %558 = sbr.rel (%p556) target = $region115
                $region112: #{classification_head.1} parent=107 // loop_body
                  %v562 = vld [vmem:[%s560] sm:$0xff]
                  %563 = vst [vmem:[%s561] sm:$0xff] %v562
                  %v564 = vld [vmem:[%s560 + $0x8] sm:$0xff]
                  %565 = vst [vmem:[%s561 + $0x10] sm:$0xff] %v564
                $region113: #{classification_head.1} parent=107 // loop_footer
                  %s559 = sadd.s32 1, %s555
                $region114: #{classification_head.1} parent=107 // loop_footer_branch
                  %554 = sbr.rel target = $region110
                $region115: #{classification_head.1} parent=107 // loop_exit
                  _
              $region108: #{classification_head.1} parent=92 // pred_fallthru
                _
              // Predicated region
              $region116: #{classification_head.1} parent=92 // pred_check
                _
              $region117: #{classification_head.1} parent=92 // pred_check_branch
                %567 = sbr.rel target = $region119
              $region118: #{classification_head.1} parent=92 // pred_region
                _
              $region119: #{classification_head.1} parent=92 // pred_fallthru
                _
            $region93: #{classification_head.1} parent=88 // pred_fallthru
              _
            // Predicated region
            $region94: #{classification_head.1} parent=88 // pred_check
              _
            $region95: #{classification_head.1} parent=88 // pred_check_branch
              %537 = sbr.rel target = $region97
            $region96: #{classification_head.1} parent=88 // pred_region
              %s539 = ssub.s32 256, 1
              loop: start=0, step=1, limit=1
              $region98: #{classification_head.1} parent=96 // loop_pre_header
                _
              $region99: #{classification_head.1} parent=96 // loop_header
                %s541 = sphi 0, %s545
                %p542 = scmp.ge.s32.totalorder %s541, 1
                %s546 = sphi %s526, %s526
                %s547 = sphi %s531, %s531
              $region100: #{classification_head.1} parent=96 // loop_header_branch
                %544 = sbr.rel (%p542) target = $region104
              $region101: #{classification_head.1} parent=96 // loop_body
                %v548 = vld [vmem:[%s546] sm:%s539]
                %549 = vst [vmem:[%s547] sm:%s539] %v548
                %v550 = vld [vmem:[%s546 + $0x8] sm:%s539]
                %551 = vst [vmem:[%s547 + $0x10] sm:%s539] %v550
              $region102: #{classification_head.1} parent=96 // loop_footer
                %s545 = sadd.s32 1, %s541
              $region103: #{classification_head.1} parent=96 // loop_footer_branch
                %540 = sbr.rel target = $region99
              $region104: #{classification_head.1} parent=96 // loop_exit
                _
            $region97: #{classification_head.1} parent=88 // pred_fallthru
              _
          $region89: #{classification_head.1} parent=84 // pred_fallthru
            _
          %568 = vnop
        $region85: #{classification_head.1} parent=76 // pred_fallthru
          _
      $region77: #{classification_head.1} parent=5 // pred_fallthru
        _
      %p569 = scmp.le.s32.totalorder 2, %s11
      // Predicated region
      $region120: #{classification_head.1} parent=5 // pred_check
        %p570 = pneg %p569
      $region121: #{classification_head.1} parent=5 // pred_check_branch
        %572 = sbr.rel (%p570) target = $region123
      $region122: #{classification_head.1} parent=5 // pred_region
        %s573 = ssub.s32 %s11, 2
        // Predicated region
        $region124: #{classification_head.1} parent=122 // pred_check
          %p574 = pneg %p150
        $region125: #{classification_head.1} parent=122 // pred_check_branch
          %576 = sbr.rel (%p574) target = $region127
        $region126: #{classification_head.1} parent=122 // pred_region
          %s577 = sand.u32 %s135, 1
          %s578 = sand.u32 %s135, 1
          %s579 = smul.addr %s578, 16
          %s580 = scalar_lea.vmem [#allocation3], %s579
        $region127: #{classification_head.1} parent=122 // pred_fallthru
          _
      $region123: #{classification_head.1} parent=5 // pred_fallthru
        _
    $region6: #{classification_head.1} parent=1 // loop_footer
      %s15 = sadd.s32 1, %s11
    $region7: #{classification_head.1} parent=1 // loop_footer_branch
      %10 = sbr.rel target = $region3
    $region8: #{classification_head.1} parent=1 // loop_exit
      _

</llo_original>
